<compile_context>
chip_gen: v6e
topology: v6e:2x2x1
jax: 0.10.0
libtpu: 0.0.40
codegen_flags: <defaults>
</compile_context>

<pallas_src>
import functools

import jax
import jax.numpy as jnp
from jax.experimental import pallas as pl
from jax.experimental.pallas import tpu as pltpu

_LANE = 128


def _round_up(x, m):
    return ((x + m - 1) // m) * m


def _vq_topk_kernel(zaug_ref, w_ref, ediv_ref, zqt_ref, idxt_ref, sse_ref,
                    *, top_k, latent_dim, n_valid):
    # zaug_ref: (latent_dim+1, tile_n)  z^T with a ones row appended
    # w_ref:    (K, latent_dim+1)       [-2*E | ||e||^2]   (VMEM resident)
    # ediv_ref: (latent_dim, K)         E^T / top_k        (VMEM resident)
    # zqt_ref:  (latent_dim, tile_n)    z_q^T (lane-dense output)
    # idxt_ref: (top_k, tile_n)         top-k indices, transposed (lane-dense)
    # sse_ref:  (1, 1, 128)             per-tile partial SSE (broadcast scalar)
    i = pl.program_id(0)
    zaug = zaug_ref[...].astype(jnp.float32)                 # (latent_dim+1, tile_n)
    tile_n = zaug.shape[1]
    K = w_ref.shape[0]

    # d^T = ||e||^2 - 2 E z^T  (per-row ||z||^2 dropped: argmin-invariant).
    # Scale and bias are folded into one MXU matmul via the ones row of z_aug.
    d = jnp.dot(w_ref[...].astype(jnp.float32), zaug,
                preferred_element_type=jnp.float32)          # (K, tile_n)

    row = jax.lax.broadcasted_iota(jnp.int32, (K, tile_n), 0)

    # Iterative extraction of the top_k smallest distances (first-index
    # tie-break, matching lax.top_k).  K on sublanes, rows on lanes.
    zq = jnp.zeros((latent_dim, tile_n), jnp.float32)
    for k in range(top_k):
        d_min = jnp.min(d, axis=0, keepdims=True)                              # (1, tile_n)
        idx_k = jnp.min(jnp.where(d <= d_min, row, K), axis=0, keepdims=True)  # (1, tile_n)
        sel = row == idx_k                                                     # (K, tile_n)
        # Accumulate z_q^T directly via a small MXU matmul (no multihot temp);
        # the 1/top_k mean is pre-folded into ediv.
        zq = zq + jnp.dot(ediv_ref[...].astype(jnp.float32), sel.astype(jnp.float32),
                          preferred_element_type=jnp.float32)
        d = jnp.where(sel, jnp.inf, d)
        idxt_ref[pl.ds(k, 1), :] = idx_k

    zqt_ref[...] = zq.astype(zqt_ref.dtype)

    # Fused (masked) partial sum of squared error for the MSE loss; padded
    # columns of the last tile are excluded.
    col = jax.lax.broadcasted_iota(jnp.int32, (1, tile_n), 1) + i * tile_n
    valid = (col < n_valid).astype(jnp.float32)
    diff = (zq - zaug[:latent_dim, :]) * valid
    sse = jnp.sum(diff * diff)
    sse_ref[...] = jnp.zeros(sse_ref.shape, jnp.float32) + sse


def _vq_topk_pallas(z_aug, w, e_div, *, top_k, tile_n, n_valid, out_dtype):
    feat1, n_pad = z_aug.shape
    latent_dim = feat1 - 1
    K = w.shape[0]
    num_tiles = n_pad // tile_n

    kernel = functools.partial(_vq_topk_kernel, top_k=top_k,
                               latent_dim=latent_dim, n_valid=n_valid)

    out_shapes = (
        jax.ShapeDtypeStruct((latent_dim, n_pad), out_dtype),    # z_q^T
        jax.ShapeDtypeStruct((top_k, n_pad), jnp.int32),         # top-k indices^T
        jax.ShapeDtypeStruct((num_tiles, 1, 128), jnp.float32),  # per-tile SSE partials
    )
    return pl.pallas_call(
        kernel,
        out_shape=out_shapes,
        grid_spec=pltpu.PrefetchScalarGridSpec(
            num_scalar_prefetch=0,
            grid=(num_tiles,),
            in_specs=[
                pl.BlockSpec((feat1, tile_n), lambda i: (0, i)),      # z^T (+ones row)
                pl.BlockSpec((K, feat1), lambda i: (0, 0)),           # [-2E | e_sq] (resident)
                pl.BlockSpec((latent_dim, K), lambda i: (0, 0)),      # E^T / top_k (resident)
            ],
            out_specs=[
                pl.BlockSpec((latent_dim, tile_n), lambda i: (0, i)),
                pl.BlockSpec((top_k, tile_n), lambda i: (0, i)),
                pl.BlockSpec((1, 1, 128), lambda i: (i, 0, 0)),
            ],
        ),
        compiler_params=pltpu.CompilerParams(
            dimension_semantics=("parallel",)),
    )(z_aug, w, e_div)


@functools.partial(jax.jit, static_argnames=("beta_c", "legacy", "top_k", "tile_n"))
def codebook_topk_forward(z, embedding, *, beta_c=0.25, legacy=False, top_k=3,
                          tile_n=2048):
    """Codebook_topk.forward.

    z: any shape whose flattening groups into rows of latent_dim (the module does
       z.view(-1, latent_dim) with no permute), e.g. (B, D, H, W, latent_dim).
    embedding: (size, latent_dim)
    Returns (z_q, loss, (perplexity, topk_encodings, topk_indices)).
    """
    K, latent_dim = embedding.shape
    z_flat = z.reshape(-1, latent_dim)
    N = z_flat.shape[0]

    # Row axis sits on lanes -> tile must be a multiple of 128.  Prefer >=2 grid
    # steps when there is enough work so megacore (v7x) keeps both TCs busy.
    tile = max(_LANE, min(tile_n, _round_up(N, _LANE)))
    tile = _round_up(tile, _LANE)
    if _round_up(N, tile) == tile and N > _LANE:
        tile = _round_up(-(-N // 2), _LANE)
    n_pad = _round_up(N, tile)

    # Transposed (feature-major) operands; -2 / ||e||^2 / 1/top_k folded in here.
    e32 = embedding.astype(jnp.float32)
    z32 = z_flat.astype(jnp.float32)
    z_aug = jnp.concatenate([z32.T, jnp.ones((1, N), jnp.float32)], axis=0)
    if n_pad != N:
        z_aug = jnp.pad(z_aug, ((0, 0), (0, n_pad - N)))
    w = jnp.concatenate([-2.0 * e32, jnp.sum(e32 * e32, axis=1, keepdims=True)],
                        axis=1)                                 # (K, latent_dim+1)
    e_div = e32.T / top_k                                       # (latent_dim, K)

    zq_t, idx_t, sse_part = _vq_topk_pallas(
        z_aug, w, e_div, top_k=top_k, tile_n=tile, n_valid=N, out_dtype=z.dtype)

    z_q = zq_t[:, :N].T.reshape(z.shape)
    topk_idx = idx_t[:, :N].T                                   # (N, top_k)

    # Rebuild encodings in the wrapper (module returns them); XLA fuses one_hot
    # with the e_mean reduction.
    topk_enc = jax.nn.one_hot(topk_idx, K, dtype=z.dtype)       # (N, top_k, K)

    # MSE from fused per-tile partial sums (no extra HBM pass over z / z_q).
    sse = jnp.sum(sse_part[:, 0, 0])
    mse = sse / (N * latent_dim)
    if legacy:
        loss = mse + beta_c * mse
    else:
        loss = beta_c * mse + mse

    e_mean = jnp.mean(jnp.mean(topk_enc, axis=0), axis=0)
    perplexity = jnp.exp(-jnp.sum(e_mean * jnp.log(e_mean + 1e-10)))

    # Straight-through (forward value == z_q).
    z_q_st = z + jax.lax.stop_gradient(z_q - z)
    return z_q_st, loss, (perplexity, topk_enc, topk_idx)


def reference_forward(z, embedding, *, beta_c=0.25, legacy=False, top_k=3):
    """Pure-JAX reference mirroring the PyTorch module."""
    K, latent_dim = embedding.shape
    zf = z.reshape(-1, latent_dim)
    d = (jnp.sum(zf ** 2, axis=1, keepdims=True)
         + jnp.sum(embedding ** 2, axis=1)
         - 2.0 * zf @ embedding.T)
    _, idx = jax.lax.top_k(-d, top_k)                           # smallest distances
    idx = idx.astype(jnp.int32)
    enc = jax.nn.one_hot(idx, K, dtype=z.dtype)                 # (N, top_k, K)
    zq = jnp.take(embedding, idx, axis=0).mean(axis=1).reshape(z.shape)
    mse = jnp.mean((zq - z) ** 2)
    loss = mse + beta_c * mse if legacy else beta_c * mse + mse
    e_mean = jnp.mean(jnp.mean(enc, axis=0), axis=0)
    perp = jnp.exp(-jnp.sum(e_mean * jnp.log(e_mean + 1e-10)))
    zq_st = z + jax.lax.stop_gradient(zq - z)
    return zq_st, loss, (perp, enc, idx)


if __name__ == "__main__":
    # Module config (synthetic, deterministic init -- no checkpoint load).
    size = 64          # codebook size K
    latent_dim = 16
    beta_c = 0.25
    legacy = False
    top_k = 3

    key = jax.random.PRNGKey(0)
    k_emb, k_z = jax.random.split(key)

    # nn.Embedding(size, latent_dim).weight.data.uniform_(-1/size, 1/size)
    embedding = jax.random.uniform(
        k_emb, (size, latent_dim), dtype=jnp.float32,
        minval=-1.0 / size, maxval=1.0 / size)

    # z laid out so view(-1, latent_dim) groups per-voxel latents: N = 2*4*4*4 = 128
    B, Dd, H, W = 2, 4, 4, 4
    z = jax.random.normal(k_z, (B, Dd, H, W, latent_dim), dtype=jnp.float32)

    z_q, loss, (perplexity, topk_enc, topk_idx) = codebook_topk_forward(
        z, embedding, beta_c=beta_c, legacy=legacy, top_k=top_k, tile_n=2048)
    jax.block_until_ready((z_q, loss, perplexity, topk_enc, topk_idx))

    # Sanity check against pure-JAX reference.
    z_q_ref, loss_ref, (perp_ref, enc_ref, idx_ref) = reference_forward(
        z, embedding, beta_c=beta_c, legacy=legacy, top_k=top_k)

    N = B * Dd * H * W
    assert z_q.shape == z.shape
    assert topk_idx.shape == (N, top_k)
    assert topk_enc.shape == (N, top_k, size)
    assert jnp.array_equal(topk_idx, idx_ref)
    assert jnp.allclose(topk_enc, enc_ref)
    assert jnp.allclose(z_q, z_q_ref, atol=1e-5)
    assert jnp.allclose(loss, loss_ref, rtol=1e-4, atol=1e-5)
    assert jnp.allclose(perplexity, perp_ref, rtol=1e-4, atol=1e-4)

    print("KERNEL_OK")
</pallas_src>

<mosaic_0001>
module attributes {stable_mosaic.version = 11 : i64} {
  func.func @_vq_topk_kernel(%arg0: i32, %arg1: memref<17x128xf32, #tpu.memory_space<vmem>>, %arg2: memref<64x17xf32, #tpu.memory_space<vmem>>, %arg3: memref<16x64xf32, #tpu.memory_space<vmem>>, %arg4: memref<16x128xf32, #tpu.memory_space<vmem>>, %arg5: memref<3x128xi32, #tpu.memory_space<vmem>>, %arg6: memref<1x1x128xf32, #tpu.memory_space<vmem>>) attributes {dimension_semantics = [#tpu.dimension_semantics<parallel>], iteration_bounds = array<i64: 1>, scalar_prefetch = 0 : i64, scratch_operands = 0 : i64, tpu.core_type = #tpu.core_type<tc>, window_params = [{transform_indices = @transform_0, window_bounds = array<i64: 17, 128>}, {pipeline_mode = #tpu.pipeline_mode<synchronous>, transform_indices = @transform_1, window_bounds = array<i64: 64, 17>}, {pipeline_mode = #tpu.pipeline_mode<synchronous>, transform_indices = @transform_2, window_bounds = array<i64: 16, 64>}, {transform_indices = @transform_3, window_bounds = array<i64: 16, 128>}, {transform_indices = @transform_4, window_bounds = array<i64: 3, 128>}, {transform_indices = @transform_5, window_bounds = array<i64: 1, 1, 128>}]} {
    %c0 = arith.constant 0 : index
    %c0_0 = arith.constant 0 : index
    %0 = vector.load %arg1[%c0, %c0_0] : memref<17x128xf32, #tpu.memory_space<vmem>>, vector<17x128xf32>
    %c0_1 = arith.constant 0 : index
    %c0_2 = arith.constant 0 : index
    %1 = vector.load %arg2[%c0_1, %c0_2] : memref<64x17xf32, #tpu.memory_space<vmem>>, vector<64x17xf32>
    %cst = arith.constant dense<0.000000e+00> : vector<64x128xf32>
    %2 = tpu.matmul %1, %0, %cst {dimension_numbers = #tpu.dot_dimension_numbers<[1], [0], [0], [1], [0, 0, 1, 1], [], []>} : vector<64x17xf32>, vector<17x128xf32>, vector<64x128xf32> -> vector<64x128xf32>
    %3 = tpu.iota {dimensions = array<i32: 0>} : vector<64x128xi32>
    %cst_3 = arith.constant 0.000000e+00 : f32
    %4 = vector.broadcast %cst_3 : f32 to vector<16x128xf32>
    %cst_4 = arith.constant dense<0x7F800000> : vector<128xf32>
    %5 = vector.multi_reduction <minimumf>, %2, %cst_4 [0] : vector<64x128xf32> to vector<128xf32>
    %6 = vector.shape_cast %5 : vector<128xf32> to vector<1x128xf32>
    %7 = vector.broadcast %6 : vector<1x128xf32> to vector<64x128xf32>
    %8 = arith.cmpf ole, %2, %7 : vector<64x128xf32>
    %c64_i32 = arith.constant 64 : i32
    %9 = vector.broadcast %c64_i32 : i32 to vector<64x128xi32>
    %10 = arith.select %8, %3, %9 : vector<64x128xi1>, vector<64x128xi32>
    %cst_5 = arith.constant dense<2147483647> : vector<128xi32>
    %11 = vector.multi_reduction <minsi>, %10, %cst_5 [0] : vector<64x128xi32> to vector<128xi32>
    %12 = vector.shape_cast %11 : vector<128xi32> to vector<1x128xi32>
    %13 = vector.broadcast %12 : vector<1x128xi32> to vector<64x128xi32>
    %14 = arith.cmpi eq, %3, %13 : vector<64x128xi32>
    %c0_6 = arith.constant 0 : index
    %c0_7 = arith.constant 0 : index
    %15 = vector.load %arg3[%c0_6, %c0_7] : memref<16x64xf32, #tpu.memory_space<vmem>>, vector<16x64xf32>
    %16 = arith.extui %14 : vector<64x128xi1> to vector<64x128xi32>
    %17 = arith.sitofp %16 : vector<64x128xi32> to vector<64x128xf32>
    %cst_8 = arith.constant dense<0.000000e+00> : vector<16x128xf32>
    %18 = tpu.matmul %15, %17, %cst_8 {dimension_numbers = #tpu.dot_dimension_numbers<[1], [0], [0], [1], [0, 0, 1, 1], [], []>} : vector<16x64xf32>, vector<64x128xf32>, vector<16x128xf32> -> vector<16x128xf32>
    %19 = arith.addf %4, %18 : vector<16x128xf32>
    %cst_9 = arith.constant 0x7F800000 : f32
    %20 = vector.broadcast %cst_9 : f32 to vector<64x128xf32>
    %21 = arith.select %14, %20, %2 : vector<64x128xi1>, vector<64x128xf32>
    %c0_10 = arith.constant 0 : index
    %c0_11 = arith.constant 0 : index
    %22 = vector.load %arg5[%c0_10, %c0_11] : memref<3x128xi32, #tpu.memory_space<vmem>>, vector<1x128xi32>
    tpu.vector_store %arg5[%c0_10, %c0_11], %12 {strides = array<i32>} : memref<3x128xi32, #tpu.memory_space<vmem>>, vector<1x128xi32>,
    %cst_12 = arith.constant dense<0x7F800000> : vector<128xf32>
    %23 = vector.multi_reduction <minimumf>, %21, %cst_12 [0] : vector<64x128xf32> to vector<128xf32>
    %24 = vector.shape_cast %23 : vector<128xf32> to vector<1x128xf32>
    %25 = vector.broadcast %24 : vector<1x128xf32> to vector<64x128xf32>
    %26 = arith.cmpf ole, %21, %25 : vector<64x128xf32>
    %c64_i32_13 = arith.constant 64 : i32
    %27 = vector.broadcast %c64_i32_13 : i32 to vector<64x128xi32>
    %28 = arith.select %26, %3, %27 : vector<64x128xi1>, vector<64x128xi32>
    %cst_14 = arith.constant dense<2147483647> : vector<128xi32>
    %29 = vector.multi_reduction <minsi>, %28, %cst_14 [0] : vector<64x128xi32> to vector<128xi32>
    %30 = vector.shape_cast %29 : vector<128xi32> to vector<1x128xi32>
    %31 = vector.broadcast %30 : vector<1x128xi32> to vector<64x128xi32>
    %32 = arith.cmpi eq, %3, %31 : vector<64x128xi32>
    %c0_15 = arith.constant 0 : index
    %c0_16 = arith.constant 0 : index
    %33 = vector.load %arg3[%c0_15, %c0_16] : memref<16x64xf32, #tpu.memory_space<vmem>>, vector<16x64xf32>
    %34 = arith.extui %32 : vector<64x128xi1> to vector<64x128xi32>
    %35 = arith.sitofp %34 : vector<64x128xi32> to vector<64x128xf32>
    %cst_17 = arith.constant dense<0.000000e+00> : vector<16x128xf32>
    %36 = tpu.matmul %33, %35, %cst_17 {dimension_numbers = #tpu.dot_dimension_numbers<[1], [0], [0], [1], [0, 0, 1, 1], [], []>} : vector<16x64xf32>, vector<64x128xf32>, vector<16x128xf32> -> vector<16x128xf32>
    %37 = arith.addf %19, %36 : vector<16x128xf32>
    %cst_18 = arith.constant 0x7F800000 : f32
    %38 = vector.broadcast %cst_18 : f32 to vector<64x128xf32>
    %39 = arith.select %32, %38, %21 : vector<64x128xi1>, vector<64x128xf32>
    %c1 = arith.constant 1 : index
    %c0_19 = arith.constant 0 : index
    %40 = vector.load %arg5[%c1, %c0_19] : memref<3x128xi32, #tpu.memory_space<vmem>>, vector<1x128xi32>
    tpu.vector_store %arg5[%c1, %c0_19], %30 {strides = array<i32>} : memref<3x128xi32, #tpu.memory_space<vmem>>, vector<1x128xi32>,
    %cst_20 = arith.constant dense<0x7F800000> : vector<128xf32>
    %41 = vector.multi_reduction <minimumf>, %39, %cst_20 [0] : vector<64x128xf32> to vector<128xf32>
    %42 = vector.shape_cast %41 : vector<128xf32> to vector<1x128xf32>
    %43 = vector.broadcast %42 : vector<1x128xf32> to vector<64x128xf32>
    %44 = arith.cmpf ole, %39, %43 : vector<64x128xf32>
    %c64_i32_21 = arith.constant 64 : i32
    %45 = vector.broadcast %c64_i32_21 : i32 to vector<64x128xi32>
    %46 = arith.select %44, %3, %45 : vector<64x128xi1>, vector<64x128xi32>
    %cst_22 = arith.constant dense<2147483647> : vector<128xi32>
    %47 = vector.multi_reduction <minsi>, %46, %cst_22 [0] : vector<64x128xi32> to vector<128xi32>
    %48 = vector.shape_cast %47 : vector<128xi32> to vector<1x128xi32>
    %49 = vector.broadcast %48 : vector<1x128xi32> to vector<64x128xi32>
    %50 = arith.cmpi eq, %3, %49 : vector<64x128xi32>
    %c0_23 = arith.constant 0 : index
    %c0_24 = arith.constant 0 : index
    %51 = vector.load %arg3[%c0_23, %c0_24] : memref<16x64xf32, #tpu.memory_space<vmem>>, vector<16x64xf32>
    %52 = arith.extui %50 : vector<64x128xi1> to vector<64x128xi32>
    %53 = arith.sitofp %52 : vector<64x128xi32> to vector<64x128xf32>
    %cst_25 = arith.constant dense<0.000000e+00> : vector<16x128xf32>
    %54 = tpu.matmul %51, %53, %cst_25 {dimension_numbers = #tpu.dot_dimension_numbers<[1], [0], [0], [1], [0, 0, 1, 1], [], []>} : vector<16x64xf32>, vector<64x128xf32>, vector<16x128xf32> -> vector<16x128xf32>
    %55 = arith.addf %37, %54 : vector<16x128xf32>
    %c2 = arith.constant 2 : index
    %c0_26 = arith.constant 0 : index
    %56 = vector.load %arg5[%c2, %c0_26] : memref<3x128xi32, #tpu.memory_space<vmem>>, vector<1x128xi32>
    tpu.vector_store %arg5[%c2, %c0_26], %48 {strides = array<i32>} : memref<3x128xi32, #tpu.memory_space<vmem>>, vector<1x128xi32>,
    %c0_27 = arith.constant 0 : index
    %c0_28 = arith.constant 0 : index
    %57 = vector.load %arg4[%c0_27, %c0_28] : memref<16x128xf32, #tpu.memory_space<vmem>>, vector<16x128xf32>
    tpu.vector_store %arg4[%c0_27, %c0_28], %55 {strides = array<i32>} : memref<16x128xf32, #tpu.memory_space<vmem>>, vector<16x128xf32>,
    %58 = tpu.iota {dimensions = array<i32: 1>} : vector<1x128xi32>
    %c128_i32 = arith.constant 128 : i32
    %59 = arith.muli %arg0, %c128_i32 : i32
    %60 = vector.broadcast %59 : i32 to vector<1x128xi32>
    %61 = arith.addi %58, %60 : vector<1x128xi32>
    %c128_i32_29 = arith.constant 128 : i32
    %62 = vector.broadcast %c128_i32_29 : i32 to vector<1x128xi32>
    %63 = arith.cmpi slt, %61, %62 : vector<1x128xi32>
    %64 = arith.extui %63 : vector<1x128xi1> to vector<1x128xi32>
    %65 = arith.sitofp %64 : vector<1x128xi32> to vector<1x128xf32>
    %66 = vector.extract_strided_slice %0 {offsets = [0, 0], sizes = [16, 128], strides = [1, 1]} : vector<17x128xf32> to vector<16x128xf32>
    %67 = arith.subf %55, %66 : vector<16x128xf32>
    %68 = vector.broadcast %65 : vector<1x128xf32> to vector<16x128xf32>
    %69 = arith.mulf %67, %68 : vector<16x128xf32>
    %70 = arith.mulf %69, %69 : vector<16x128xf32>
    %71 = vector.shape_cast %70 : vector<16x128xf32> to vector<1x16x128xf32>
    %cst_30 = arith.constant dense<0.000000e+00> : vector<1xf32>
    %72 = vector.multi_reduction <add>, %71, %cst_30 [1, 2] : vector<1x16x128xf32> to vector<1xf32>
    %73 = vector.shape_cast %72 : vector<1xf32> to vector<1x1x1xf32>
    %74 = vector.extract %73[0, 0, 0] : f32 from vector<1x1x1xf32>
    %cst_31 = arith.constant 0.000000e+00 : f32
    %75 = vector.broadcast %cst_31 : f32 to vector<1x1x128xf32>
    %76 = vector.broadcast %74 : f32 to vector<1x1x128xf32>
    %77 = arith.addf %75, %76 : vector<1x1x128xf32>
    %c0_32 = arith.constant 0 : index
    %c0_33 = arith.constant 0 : index
    %c0_34 = arith.constant 0 : index
    %78 = vector.load %arg6[%c0_32, %c0_33, %c0_34] : memref<1x1x128xf32, #tpu.memory_space<vmem>>, vector<1x1x128xf32>
    tpu.vector_store %arg6[%c0_32, %c0_33, %c0_34], %77 {strides = array<i32>} : memref<1x1x128xf32, #tpu.memory_space<vmem>>, vector<1x1x128xf32>,
    return
  }
  func.func @transform_0(%arg0: i32) -> (i32, i32) {
    %c0_i32 = arith.constant 0 : i32
    %c0_i32_0 = arith.constant 0 : i32
    return %c0_i32, %arg0 : i32, i32
  }
  func.func @transform_1(%arg0: i32) -> (i32, i32) {
    %c0_i32 = arith.constant 0 : i32
    %c0_i32_0 = arith.constant 0 : i32
    %c0_i32_1 = arith.constant 0 : i32
    return %c0_i32, %c0_i32_0 : i32, i32
  }
  func.func @transform_2(%arg0: i32) -> (i32, i32) {
    %c0_i32 = arith.constant 0 : i32
    %c0_i32_0 = arith.constant 0 : i32
    %c0_i32_1 = arith.constant 0 : i32
    return %c0_i32, %c0_i32_0 : i32, i32
  }
  func.func @transform_3(%arg0: i32) -> (i32, i32) {
    %c0_i32 = arith.constant 0 : i32
    %c0_i32_0 = arith.constant 0 : i32
    return %c0_i32, %arg0 : i32, i32
  }
  func.func @transform_4(%arg0: i32) -> (i32, i32) {
    %c0_i32 = arith.constant 0 : i32
    %c0_i32_0 = arith.constant 0 : i32
    return %c0_i32, %arg0 : i32, i32
  }
  func.func @transform_5(%arg0: i32) -> (i32, i32, i32) {
    %c0_i32 = arith.constant 0 : i32
    %c0_i32_0 = arith.constant 0 : i32
    %c0_i32_1 = arith.constant 0 : i32
    return %arg0, %c0_i32, %c0_i32_0 : i32, i32, i32
  }
}

</mosaic_0001>

<llo_original>
// kernel: codebook_topk_forward.1
$region0: #{codebook_topk_forward.1}
  #allocation0 [shape = 'u32[]', space=smem, size = 0x4, offset = 0x4, fixed_abs, tag = 'smem constant byte address 0x4 - core index']
  #allocation1 [shape = 'u32[144,128]{1,0:T(1,128)}', space=vmem, size = 0x12000, scoped, tag = 'internal scratch']
  %s0 = inlined_call_operand.vmem [shape: f32[17,128], index: 0, kind: input, shape index: {}]
  %s1 = inlined_call_operand.vmem [shape: f32[64,17], index: 1, kind: input, shape index: {}]
  %s2 = inlined_call_operand.vmem [shape: f32[16,64], index: 2, kind: input, shape index: {}]
  %s3 = inlined_call_operand.vmem [shape: f32[16,128], index: 3, kind: output, shape index: {0}]
  %s4 = inlined_call_operand.vmem [shape: s32[3,128], index: 4, kind: output, shape index: {1}]
  %s5 = inlined_call_operand.vmem [shape: f32[1,1,128], index: 5, kind: output, shape index: {2}]
  %6 = xla_tuple %s3, %s4, %s5
  %s7 = sld [smem:[#allocation0]]
  $region38: #{codebook_topk_forward.1} parent=0
    _
  %s9 = ssub.s32 1, %s7
  %s10 = scalar_select 0, %s9, %s7
  // Predicated region
  $region2: #{codebook_topk_forward.1} parent=0 // pred_check
    _
  $region3: #{codebook_topk_forward.1} parent=0 // pred_check_branch
    %12 = sbr.rel (0) target = $region5
  $region4: #{codebook_topk_forward.1} parent=0 // pred_region
    _
  $region5: #{codebook_topk_forward.1} parent=0 // pred_fallthru
    _
  // Predicated region
  $region6: #{codebook_topk_forward.1} parent=0 // pred_check
    _
  $region7: #{codebook_topk_forward.1} parent=0 // pred_check_branch
    %14 = sbr.rel (0) target = $region9
  $region8: #{codebook_topk_forward.1} parent=0 // pred_region
    _
  $region9: #{codebook_topk_forward.1} parent=0 // pred_fallthru
    _
  // Predicated region
  $region10: #{codebook_topk_forward.1} parent=0 // pred_check
    _
  $region11: #{codebook_topk_forward.1} parent=0 // pred_check_branch
    %16 = sbr.rel (0) target = $region13
  $region12: #{codebook_topk_forward.1} parent=0 // pred_region
    _
  $region13: #{codebook_topk_forward.1} parent=0 // pred_fallthru
    _
  %v17 = vld [vmem:[%s0] sm:$0xff]
  %v18 = vld [vmem:[%s0 + $0x8] sm:$0xff]
  %v19 = vld [vmem:[%s0 + $0x10] sm:$0x1]
  %v20 = vld [vmem:[%s1] sm:$0xff]
  %v21 = vld [vmem:[%s1 + $0x8] sm:$0xff]
  %v22 = vld [vmem:[%s1 + $0x10] sm:$0xff]
  %v23 = vld [vmem:[%s1 + $0x18] sm:$0xff]
  %v24 = vld [vmem:[%s1 + $0x20] sm:$0xff]
  %v25 = vld [vmem:[%s1 + $0x28] sm:$0xff]
  %v26 = vld [vmem:[%s1 + $0x30] sm:$0xff]
  %v27 = vld [vmem:[%s1 + $0x38] sm:$0xff]
  %vm28 = vcmask 138240
  %v30 = vsel %vm28, %v20, 0
  %v33 = vsel %vm28, %v21, 0
  %v36 = vsel %vm28, %v22, 0
  %v39 = vsel %vm28, %v23, 0
  %v42 = vsel %vm28, %v24, 0
  %v45 = vsel %vm28, %v25, 0
  %v48 = vsel %vm28, %v26, 0
  %v51 = vsel %vm28, %v27, 0
  %vm53 = vcmask 1040384
  %v55 = vsel %vm53, %v19, 0
  %57 = vmatprep.subr.mxu0 0.0
  %58 = vmatpush1.msra.mxu0 0.0
  %59 = vmatprep.subr.mxu0 0.0
  %60 = vmatpush1.msra.mxu0 0.0
  %61 = vmatprep.subr.mxu0 0.0
  %62 = vmatpush1.msra.mxu0 0.0
  %63 = vmatprep.subr.mxu0 0.0
  %64 = vmatpush1.msra.mxu0 0.0
  %65 = vmatprep.subr.mxu0 0.0
  %66 = vmatpush1.msra.mxu0 0.0
  %67 = vmatprep.subr.mxu0 0.0
  %68 = vmatpush1.msra.mxu0 0.0
  %69 = vmatprep.subr.mxu0 0.0
  %70 = vmatpush1.msra.mxu0 0.0
  %71 = vmatprep.subr.mxu0 0.0
  %72 = vmatpush1.msra.mxu0 0.0
  %73 = vmatprep.subr.mxu0 0.0
  %74 = vmatpush1.msra.mxu0 0.0
  %75 = vmatprep.subr.mxu0 0.0
  %76 = vmatpush1.msra.mxu0 0.0
  %77 = vmatprep.subr.mxu0 0.0
  %78 = vmatpush1.msra.mxu0 0.0
  %79 = vmatprep.subr.mxu0 0.0
  %80 = vmatpush1.msra.mxu0 0.0
  %81 = vmatprep.subr.mxu0 0.0
  %82 = vmatpush1.msra.mxu0 0.0
  %83 = vmatprep.subr.mxu0 0.0
  %84 = vmatpush1.msra.mxu0 %v55
  %85 = vmatprep.subr.mxu0 0.0
  %86 = vmatpush1.msra.mxu0 %v18
  %87 = vmatprep.subr.mxu0 0.0
  %88 = vmatpush1.msra.mxu0 %v17
  %89 = vmatprep.subr.mxu0 0.0
  %90 = vmatpush2.msra.mxu0 0.0
  %91 = vmatprep.subr.mxu0 0.0
  %92 = vmatpush2.msra.mxu0 0.0
  %93 = vmatprep.subr.mxu0 0.0
  %94 = vmatpush2.msra.mxu0 0.0
  %95 = vmatprep.subr.mxu0 0.0
  %96 = vmatpush2.msra.mxu0 0.0
  %97 = vmatprep.subr.mxu0 0.0
  %98 = vmatpush2.msra.mxu0 0.0
  %99 = vmatprep.subr.mxu0 0.0
  %100 = vmatpush2.msra.mxu0 0.0
  %101 = vmatprep.subr.mxu0 0.0
  %102 = vmatpush2.msra.mxu0 0.0
  %103 = vmatprep.subr.mxu0 0.0
  %104 = vmatpush2.msra.mxu0 0.0
  %105 = vmatprep.subr.mxu0 0.0
  %106 = vmatpush2.msra.mxu0 0.0
  %107 = vmatprep.subr.mxu0 0.0
  %108 = vmatpush2.msra.mxu0 0.0
  %109 = vmatprep.subr.mxu0 0.0
  %110 = vmatpush2.msra.mxu0 0.0
  %111 = vmatprep.subr.mxu0 0.0
  %112 = vmatpush2.msra.mxu0 0.0
  %113 = vmatprep.subr.mxu0 0.0
  %114 = vmatpush2.msra.mxu0 0.0
  %115 = vmatprep.subr.mxu0 0.0
  %116 = vmatpush2.msra.mxu0 0.0
  %117 = vmatprep.subr.mxu0 0.0
  %118 = vmatpush2.msra.mxu0 0.0
  %119 = vmatprep.subr.mxu0 0.0
  %120 = vmatpush2.msra.mxu0 0.0
  %121 = vmatprep.mubr.f32.mxu0 0.0
  %122 = vmatmul.mubr.f32.gmra.mxu0 %v30
  %v123 = vpop.f32.mrf.mxu0
  %v124 = vadd.f32 0.0, %v123
  %v125 = vpop.f32.mrf.mxu0
  %126 = vmatprep.mubr.f32.mxu0 0.0
  %127 = vmatmul.mubr.f32.gmra.mxu0 %v33
  %v128 = vpop.f32.mrf.mxu0
  %v129 = vadd.f32 0.0, %v128
  %v130 = vpop.f32.mrf.mxu0
  %131 = vmatprep.mubr.f32.mxu0 0.0
  %132 = vmatmul.mubr.f32.gmra.mxu0 %v36
  %v133 = vpop.f32.mrf.mxu0
  %v134 = vadd.f32 0.0, %v133
  %v135 = vpop.f32.mrf.mxu0
  %136 = vmatprep.mubr.f32.mxu0 0.0
  %137 = vmatmul.mubr.f32.gmra.mxu0 %v39
  %v138 = vpop.f32.mrf.mxu0
  %v139 = vadd.f32 0.0, %v138
  %v140 = vpop.f32.mrf.mxu0
  %141 = vmatprep.mubr.f32.mxu0 0.0
  %142 = vmatmul.mubr.f32.gmra.mxu0 %v42
  %v143 = vpop.f32.mrf.mxu0
  %v144 = vadd.f32 0.0, %v143
  %v145 = vpop.f32.mrf.mxu0
  %146 = vmatprep.mubr.f32.mxu0 0.0
  %147 = vmatmul.mubr.f32.gmra.mxu0 %v45
  %v148 = vpop.f32.mrf.mxu0
  %v149 = vadd.f32 0.0, %v148
  %v150 = vpop.f32.mrf.mxu0
  %151 = vmatprep.mubr.f32.mxu0 0.0
  %152 = vmatmul.mubr.f32.gmra.mxu0 %v48
  %v153 = vpop.f32.mrf.mxu0
  %v154 = vadd.f32 0.0, %v153
  %v155 = vpop.f32.mrf.mxu0
  %156 = vmatprep.mubr.f32.mxu0 0.0
  %157 = vmatmul.mubr.f32.gmra.mxu0 %v51
  %v158 = vpop.f32.mrf.mxu0
  %v159 = vadd.f32 0.0, %v158
  %v160 = vpop.f32.mrf.mxu0
  %161 = vdwg.mxu0
  %v162 = vlaneseq
  %v163 = vshrl.u32 %v162, 7
  %v164 = vadd.s32 %v163, 8
  %v165 = vadd.s32 %v163, 16
  %v166 = vadd.s32 %v163, 24
  %v167 = vadd.s32 %v163, 32
  %v168 = vadd.s32 %v163, 40
  %v169 = vadd.s32 %v163, 48
  %v170 = vadd.s32 %v163, 56
  %v171 = vmin.f32 %v124, %v144
  %v172 = vmin.f32 %v129, %v149
  %v173 = vmin.f32 %v134, %v154
  %v174 = vmin.f32 %v139, %v159
  %v175 = vmin.f32 %v171, %v172
  %v176 = vmin.f32 %v173, %v174
  %v177 = vmin.f32 %v175, %v176
  %v178 = vrot.slane %v177, 4
  %v179 = vmin.f32 %v177, %v178
  %v180 = vrot.slane %v179, 2
  %v181 = vmin.f32 %v179, %v180
  %v182 = vrot.slane %v181, 1
  %v183 = vmin.f32 %v181, %v182
  %vm184 = vcmp.le.f32.partialorder %v124, %v183
  %vm185 = vcmp.le.f32.partialorder %v129, %v183
  %vm186 = vcmp.le.f32.partialorder %v134, %v183
  %vm187 = vcmp.le.f32.partialorder %v139, %v183
  %vm188 = vcmp.le.f32.partialorder %v144, %v183
  %vm189 = vcmp.le.f32.partialorder %v149, %v183
  %vm190 = vcmp.le.f32.partialorder %v154, %v183
  %vm191 = vcmp.le.f32.partialorder %v159, %v183
  %v192 = vsel %vm184, %v163, 64
  %v193 = vsel %vm185, %v164, 64
  %v194 = vsel %vm186, %v165, 64
  %v195 = vsel %vm187, %v166, 64
  %v196 = vsel %vm188, %v167, 64
  %v197 = vsel %vm189, %v168, 64
  %v198 = vsel %vm190, %v169, 64
  %v199 = vsel %vm191, %v170, 64
  %vm200 = vcmp.lt.s32.totalorder %v192, %v196
  %v201 = vsel %vm200, %v192, %v196
  %vm202 = vcmp.lt.s32.totalorder %v193, %v197
  %v203 = vsel %vm202, %v193, %v197
  %vm204 = vcmp.lt.s32.totalorder %v194, %v198
  %v205 = vsel %vm204, %v194, %v198
  %vm206 = vcmp.lt.s32.totalorder %v195, %v199
  %v207 = vsel %vm206, %v195, %v199
  %vm208 = vcmp.lt.s32.totalorder %v201, %v203
  %v209 = vsel %vm208, %v201, %v203
  %vm210 = vcmp.lt.s32.totalorder %v205, %v207
  %v211 = vsel %vm210, %v205, %v207
  %vm212 = vcmp.lt.s32.totalorder %v209, %v211
  %v213 = vsel %vm212, %v209, %v211
  %v214 = vrot.slane %v213, 4
  %vm215 = vcmp.lt.s32.totalorder %v213, %v214
  %v216 = vsel %vm215, %v213, %v214
  %v217 = vrot.slane %v216, 2
  %vm218 = vcmp.lt.s32.totalorder %v216, %v217
  %v219 = vsel %vm218, %v216, %v217
  %v220 = vrot.slane %v219, 1
  %vm221 = vcmp.lt.s32.totalorder %v219, %v220
  %v222 = vsel %vm221, %v219, %v220
  %vm223 = vcmp.eq.s32.totalorder %v163, %v222
  %vm224 = vcmp.eq.s32.totalorder %v164, %v222
  %vm225 = vcmp.eq.s32.totalorder %v165, %v222
  %vm226 = vcmp.eq.s32.totalorder %v166, %v222
  %vm227 = vcmp.eq.s32.totalorder %v167, %v222
  %vm228 = vcmp.eq.s32.totalorder %v168, %v222
  %vm229 = vcmp.eq.s32.totalorder %v169, %v222
  %vm230 = vcmp.eq.s32.totalorder %v170, %v222
  %v231 = vld [vmem:[%s2] sm:$0xff]
  %v232 = vld [vmem:[%s2 + $0x8] sm:$0xff]
  %v233 = vsel %vm223, 1, 0
  %v234 = vsel %vm224, 1, 0
  %v235 = vsel %vm225, 1, 0
  %v236 = vsel %vm226, 1, 0
  %v237 = vsel %vm227, 1, 0
  %v238 = vsel %vm228, 1, 0
  %v239 = vsel %vm229, 1, 0
  %v240 = vsel %vm230, 1, 0
  %v241 = vcvt.s32.f32 %v233
  %v242 = vcvt.s32.f32 %v234
  %v243 = vcvt.s32.f32 %v235
  %v244 = vcvt.s32.f32 %v236
  %v245 = vcvt.s32.f32 %v237
  %v246 = vcvt.s32.f32 %v238
  %v247 = vcvt.s32.f32 %v239
  %v248 = vcvt.s32.f32 %v240
  %v249 = vsel %vm223, inf, %v124
  %v250 = vsel %vm224, inf, %v129
  %v251 = vsel %vm225, inf, %v134
  %v252 = vsel %vm226, inf, %v139
  %v253 = vsel %vm227, inf, %v144
  %v254 = vsel %vm228, inf, %v149
  %v255 = vsel %vm229, inf, %v154
  %v256 = vsel %vm230, inf, %v159
  %257 = vst [vmem:[%s4] sm:$0x1] %v222
  %v258 = vmin.f32 %v249, %v253
  %v259 = vmin.f32 %v250, %v254
  %v260 = vmin.f32 %v251, %v255
  %v261 = vmin.f32 %v252, %v256
  %v262 = vmin.f32 %v258, %v259
  %v263 = vmin.f32 %v260, %v261
  %v264 = vmin.f32 %v262, %v263
  %v265 = vrot.slane %v264, 4
  %v266 = vmin.f32 %v264, %v265
  %v267 = vrot.slane %v266, 2
  %v268 = vmin.f32 %v266, %v267
  %v269 = vrot.slane %v268, 1
  %v270 = vmin.f32 %v268, %v269
  %vm271 = vcmp.le.f32.partialorder %v249, %v270
  %vm272 = vcmp.le.f32.partialorder %v250, %v270
  %vm273 = vcmp.le.f32.partialorder %v251, %v270
  %vm274 = vcmp.le.f32.partialorder %v252, %v270
  %vm275 = vcmp.le.f32.partialorder %v253, %v270
  %vm276 = vcmp.le.f32.partialorder %v254, %v270
  %vm277 = vcmp.le.f32.partialorder %v255, %v270
  %vm278 = vcmp.le.f32.partialorder %v256, %v270
  %v279 = vsel %vm271, %v163, 64
  %v280 = vsel %vm272, %v164, 64
  %v281 = vsel %vm273, %v165, 64
  %v282 = vsel %vm274, %v166, 64
  %v283 = vsel %vm275, %v167, 64
  %v284 = vsel %vm276, %v168, 64
  %v285 = vsel %vm277, %v169, 64
  %v286 = vsel %vm278, %v170, 64
  %vm287 = vcmp.lt.s32.totalorder %v279, %v283
  %v288 = vsel %vm287, %v279, %v283
  %vm289 = vcmp.lt.s32.totalorder %v280, %v284
  %v290 = vsel %vm289, %v280, %v284
  %vm291 = vcmp.lt.s32.totalorder %v281, %v285
  %v292 = vsel %vm291, %v281, %v285
  %vm293 = vcmp.lt.s32.totalorder %v282, %v286
  %v294 = vsel %vm293, %v282, %v286
  %vm295 = vcmp.lt.s32.totalorder %v288, %v290
  %v296 = vsel %vm295, %v288, %v290
  %vm297 = vcmp.lt.s32.totalorder %v292, %v294
  %v298 = vsel %vm297, %v292, %v294
  %vm299 = vcmp.lt.s32.totalorder %v296, %v298
  %v300 = vsel %vm299, %v296, %v298
  %v301 = vrot.slane %v300, 4
  %vm302 = vcmp.lt.s32.totalorder %v300, %v301
  %v303 = vsel %vm302, %v300, %v301
  %v304 = vrot.slane %v303, 2
  %vm305 = vcmp.lt.s32.totalorder %v303, %v304
  %v306 = vsel %vm305, %v303, %v304
  %v307 = vrot.slane %v306, 1
  %vm308 = vcmp.lt.s32.totalorder %v306, %v307
  %v309 = vsel %vm308, %v306, %v307
  %vm310 = vcmp.eq.s32.totalorder %v163, %v309
  %vm311 = vcmp.eq.s32.totalorder %v164, %v309
  %vm312 = vcmp.eq.s32.totalorder %v165, %v309
  %vm313 = vcmp.eq.s32.totalorder %v166, %v309
  %vm314 = vcmp.eq.s32.totalorder %v167, %v309
  %vm315 = vcmp.eq.s32.totalorder %v168, %v309
  %vm316 = vcmp.eq.s32.totalorder %v169, %v309
  %vm317 = vcmp.eq.s32.totalorder %v170, %v309
  %v318 = vld [vmem:[%s2] sm:$0xff]
  %v319 = vld [vmem:[%s2 + $0x8] sm:$0xff]
  %v320 = vsel %vm310, 1, 0
  %v321 = vsel %vm311, 1, 0
  %v322 = vsel %vm312, 1, 0
  %v323 = vsel %vm313, 1, 0
  %v324 = vsel %vm314, 1, 0
  %v325 = vsel %vm315, 1, 0
  %v326 = vsel %vm316, 1, 0
  %v327 = vsel %vm317, 1, 0
  %v328 = vcvt.s32.f32 %v320
  %v329 = vcvt.s32.f32 %v321
  %v330 = vcvt.s32.f32 %v322
  %v331 = vcvt.s32.f32 %v323
  %v332 = vcvt.s32.f32 %v324
  %v333 = vcvt.s32.f32 %v325
  %v334 = vcvt.s32.f32 %v326
  %v335 = vcvt.s32.f32 %v327
  %vm336 = vcmask 523264
  %v338 = vsel %vm336, %v318, 0
  %v341 = vsel %vm336, %v319, 0
  %343 = vmatprep.subr.mxu0 0.0
  %344 = vmatpush1.msra.mxu0 0.0
  %345 = vmatprep.subr.mxu0 0.0
  %346 = vmatpush1.msra.mxu0 0.0
  %347 = vmatprep.subr.mxu0 0.0
  %348 = vmatpush1.msra.mxu0 0.0
  %349 = vmatprep.subr.mxu0 0.0
  %350 = vmatpush1.msra.mxu0 0.0
  %351 = vmatprep.subr.mxu0 0.0
  %352 = vmatpush1.msra.mxu0 0.0
  %353 = vmatprep.subr.mxu0 0.0
  %354 = vmatpush1.msra.mxu0 0.0
  %355 = vmatprep.subr.mxu0 0.0
  %356 = vmatpush1.msra.mxu0 0.0
  %357 = vmatprep.subr.mxu0 0.0
  %358 = vmatpush1.msra.mxu0 0.0
  %359 = vmatprep.subr.mxu0 0.0
  %360 = vmatpush1.msra.mxu0 %v335
  %361 = vmatprep.subr.mxu0 0.0
  %362 = vmatpush1.msra.mxu0 %v334
  %363 = vmatprep.subr.mxu0 0.0
  %364 = vmatpush1.msra.mxu0 %v333
  %365 = vmatprep.subr.mxu0 0.0
  %366 = vmatpush1.msra.mxu0 %v332
  %367 = vmatprep.subr.mxu0 0.0
  %368 = vmatpush1.msra.mxu0 %v331
  %369 = vmatprep.subr.mxu0 0.0
  %370 = vmatpush1.msra.mxu0 %v330
  %371 = vmatprep.subr.mxu0 0.0
  %372 = vmatpush1.msra.mxu0 %v329
  %373 = vmatprep.subr.mxu0 0.0
  %374 = vmatpush1.msra.mxu0 %v328
  %375 = vmatprep.subr.mxu0 0.0
  %376 = vmatpush2.msra.mxu0 0.0
  %377 = vmatprep.subr.mxu0 0.0
  %378 = vmatpush2.msra.mxu0 0.0
  %379 = vmatprep.subr.mxu0 0.0
  %380 = vmatpush2.msra.mxu0 0.0
  %381 = vmatprep.subr.mxu0 0.0
  %382 = vmatpush2.msra.mxu0 0.0
  %383 = vmatprep.subr.mxu0 0.0
  %384 = vmatpush2.msra.mxu0 0.0
  %385 = vmatprep.subr.mxu0 0.0
  %386 = vmatpush2.msra.mxu0 0.0
  %387 = vmatprep.subr.mxu0 0.0
  %388 = vmatpush2.msra.mxu0 0.0
  %389 = vmatprep.subr.mxu0 0.0
  %390 = vmatpush2.msra.mxu0 0.0
  %391 = vmatprep.subr.mxu0 0.0
  %392 = vmatpush2.msra.mxu0 0.0
  %393 = vmatprep.subr.mxu0 0.0
  %394 = vmatpush2.msra.mxu0 0.0
  %395 = vmatprep.subr.mxu0 0.0
  %396 = vmatpush2.msra.mxu0 0.0
  %397 = vmatprep.subr.mxu0 0.0
  %398 = vmatpush2.msra.mxu0 0.0
  %399 = vmatprep.subr.mxu0 0.0
  %400 = vmatpush2.msra.mxu0 0.0
  %401 = vmatprep.subr.mxu0 0.0
  %402 = vmatpush2.msra.mxu0 0.0
  %403 = vmatprep.subr.mxu0 0.0
  %404 = vmatpush2.msra.mxu0 0.0
  %405 = vmatprep.subr.mxu0 0.0
  %406 = vmatpush2.msra.mxu0 0.0
  %407 = vmatprep.mubr.f32.mxu0 0.0
  %408 = vmatmul.mubr.f32.gmra.mxu0 %v338
  %v409 = vpop.f32.mrf.mxu0
  %v410 = vadd.f32 0.0, %v409
  %v411 = vpop.f32.mrf.mxu0
  %412 = vmatprep.mubr.f32.mxu0 0.0
  %413 = vmatmul.mubr.f32.gmra.mxu0 %v341
  %v414 = vpop.f32.mrf.mxu0
  %v415 = vadd.f32 0.0, %v414
  %v416 = vpop.f32.mrf.mxu0
  %417 = vdwg.mxu0
  %v419 = vsel %vm336, %v231, 0
  %v422 = vsel %vm336, %v232, 0
  %424 = vmatprep.subr.mxu0 0.0
  %425 = vmatpush1.msra.mxu0 0.0
  %426 = vmatprep.subr.mxu0 0.0
  %427 = vmatpush1.msra.mxu0 0.0
  %428 = vmatprep.subr.mxu0 0.0
  %429 = vmatpush1.msra.mxu0 0.0
  %430 = vmatprep.subr.mxu0 0.0
  %431 = vmatpush1.msra.mxu0 0.0
  %432 = vmatprep.subr.mxu0 0.0
  %433 = vmatpush1.msra.mxu0 0.0
  %434 = vmatprep.subr.mxu0 0.0
  %435 = vmatpush1.msra.mxu0 0.0
  %436 = vmatprep.subr.mxu0 0.0
  %437 = vmatpush1.msra.mxu0 0.0
  %438 = vmatprep.subr.mxu0 0.0
  %439 = vmatpush1.msra.mxu0 0.0
  %440 = vmatprep.subr.mxu0 0.0
  %441 = vmatpush1.msra.mxu0 %v248
  %442 = vmatprep.subr.mxu0 0.0
  %443 = vmatpush1.msra.mxu0 %v247
  %444 = vmatprep.subr.mxu0 0.0
  %445 = vmatpush1.msra.mxu0 %v246
  %446 = vmatprep.subr.mxu0 0.0
  %447 = vmatpush1.msra.mxu0 %v245
  %448 = vmatprep.subr.mxu0 0.0
  %449 = vmatpush1.msra.mxu0 %v244
  %450 = vmatprep.subr.mxu0 0.0
  %451 = vmatpush1.msra.mxu0 %v243
  %452 = vmatprep.subr.mxu0 0.0
  %453 = vmatpush1.msra.mxu0 %v242
  %454 = vmatprep.subr.mxu0 0.0
  %455 = vmatpush1.msra.mxu0 %v241
  %456 = vmatprep.subr.mxu0 0.0
  %457 = vmatpush2.msra.mxu0 0.0
  %458 = vmatprep.subr.mxu0 0.0
  %459 = vmatpush2.msra.mxu0 0.0
  %460 = vmatprep.subr.mxu0 0.0
  %461 = vmatpush2.msra.mxu0 0.0
  %462 = vmatprep.subr.mxu0 0.0
  %463 = vmatpush2.msra.mxu0 0.0
  %464 = vmatprep.subr.mxu0 0.0
  %465 = vmatpush2.msra.mxu0 0.0
  %466 = vmatprep.subr.mxu0 0.0
  %467 = vmatpush2.msra.mxu0 0.0
  %468 = vmatprep.subr.mxu0 0.0
  %469 = vmatpush2.msra.mxu0 0.0
  %470 = vmatprep.subr.mxu0 0.0
  %471 = vmatpush2.msra.mxu0 0.0
  %472 = vmatprep.subr.mxu0 0.0
  %473 = vmatpush2.msra.mxu0 0.0
  %474 = vmatprep.subr.mxu0 0.0
  %475 = vmatpush2.msra.mxu0 0.0
  %476 = vmatprep.subr.mxu0 0.0
  %477 = vmatpush2.msra.mxu0 0.0
  %478 = vmatprep.subr.mxu0 0.0
  %479 = vmatpush2.msra.mxu0 0.0
  %480 = vmatprep.subr.mxu0 0.0
  %481 = vmatpush2.msra.mxu0 0.0
  %482 = vmatprep.subr.mxu0 0.0
  %483 = vmatpush2.msra.mxu0 0.0
  %484 = vmatprep.subr.mxu0 0.0
  %485 = vmatpush2.msra.mxu0 0.0
  %486 = vmatprep.subr.mxu0 0.0
  %487 = vmatpush2.msra.mxu0 0.0
  %488 = vmatprep.mubr.f32.mxu0 0.0
  %489 = vmatmul.mubr.f32.gmra.mxu0 %v419
  %v490 = vpop.f32.mrf.mxu0
  %v491 = vadd.f32 %v410, %v490
  %v492 = vpop.f32.mrf.mxu0
  %493 = vmatprep.mubr.f32.mxu0 0.0
  %494 = vmatmul.mubr.f32.gmra.mxu0 %v422
  %v495 = vpop.f32.mrf.mxu0
  %v496 = vadd.f32 %v415, %v495
  %v497 = vpop.f32.mrf.mxu0
  %498 = vdwg.mxu0
  %v499 = vsel %vm310, inf, %v249
  %v500 = vsel %vm311, inf, %v250
  %v501 = vsel %vm312, inf, %v251
  %v502 = vsel %vm313, inf, %v252
  %v503 = vsel %vm314, inf, %v253
  %v504 = vsel %vm315, inf, %v254
  %v505 = vsel %vm316, inf, %v255
  %v506 = vsel %vm317, inf, %v256
  %507 = vst [vmem:[%s4 + $0x1] sm:$0x1] %v309
  %v508 = vmin.f32 %v499, %v503
  %v509 = vmin.f32 %v500, %v504
  %v510 = vmin.f32 %v501, %v505
  %v511 = vmin.f32 %v502, %v506
  %v512 = vmin.f32 %v508, %v509
  %v513 = vmin.f32 %v510, %v511
  %v514 = vmin.f32 %v512, %v513
  %v515 = vrot.slane %v514, 4
  %v516 = vmin.f32 %v514, %v515
  %v517 = vrot.slane %v516, 2
  %v518 = vmin.f32 %v516, %v517
  %v519 = vrot.slane %v518, 1
  %v520 = vmin.f32 %v518, %v519
  %vm521 = vcmp.le.f32.partialorder %v499, %v520
  %vm522 = vcmp.le.f32.partialorder %v500, %v520
  %vm523 = vcmp.le.f32.partialorder %v501, %v520
  %vm524 = vcmp.le.f32.partialorder %v502, %v520
  %vm525 = vcmp.le.f32.partialorder %v503, %v520
  %vm526 = vcmp.le.f32.partialorder %v504, %v520
  %vm527 = vcmp.le.f32.partialorder %v505, %v520
  %vm528 = vcmp.le.f32.partialorder %v506, %v520
  %v529 = vsel %vm521, %v163, 64
  %v530 = vsel %vm522, %v164, 64
  %v531 = vsel %vm523, %v165, 64
  %v532 = vsel %vm524, %v166, 64
  %v533 = vsel %vm525, %v167, 64
  %v534 = vsel %vm526, %v168, 64
  %v535 = vsel %vm527, %v169, 64
  %v536 = vsel %vm528, %v170, 64
  %vm537 = vcmp.lt.s32.totalorder %v529, %v533
  %v538 = vsel %vm537, %v529, %v533
  %vm539 = vcmp.lt.s32.totalorder %v530, %v534
  %v540 = vsel %vm539, %v530, %v534
  %vm541 = vcmp.lt.s32.totalorder %v531, %v535
  %v542 = vsel %vm541, %v531, %v535
  %vm543 = vcmp.lt.s32.totalorder %v532, %v536
  %v544 = vsel %vm543, %v532, %v536
  %vm545 = vcmp.lt.s32.totalorder %v538, %v540
  %v546 = vsel %vm545, %v538, %v540
  %vm547 = vcmp.lt.s32.totalorder %v542, %v544
  %v548 = vsel %vm547, %v542, %v544
  %vm549 = vcmp.lt.s32.totalorder %v546, %v548
  %v550 = vsel %vm549, %v546, %v548
  %v551 = vrot.slane %v550, 4
  %vm552 = vcmp.lt.s32.totalorder %v550, %v551
  %v553 = vsel %vm552, %v550, %v551
  %v554 = vrot.slane %v553, 2
  %vm555 = vcmp.lt.s32.totalorder %v553, %v554
  %v556 = vsel %vm555, %v553, %v554
  %v557 = vrot.slane %v556, 1
  %vm558 = vcmp.lt.s32.totalorder %v556, %v557
  %v559 = vsel %vm558, %v556, %v557
  %vm560 = vcmp.eq.s32.totalorder %v163, %v559
  %vm561 = vcmp.eq.s32.totalorder %v164, %v559
  %vm562 = vcmp.eq.s32.totalorder %v165, %v559
  %vm563 = vcmp.eq.s32.totalorder %v166, %v559
  %vm564 = vcmp.eq.s32.totalorder %v167, %v559
  %vm565 = vcmp.eq.s32.totalorder %v168, %v559
  %vm566 = vcmp.eq.s32.totalorder %v169, %v559
  %vm567 = vcmp.eq.s32.totalorder %v170, %v559
  %v568 = vld [vmem:[%s2] sm:$0xff]
  %v569 = vld [vmem:[%s2 + $0x8] sm:$0xff]
  %v570 = vsel %vm560, 1, 0
  %v571 = vsel %vm561, 1, 0
  %v572 = vsel %vm562, 1, 0
  %v573 = vsel %vm563, 1, 0
  %v574 = vsel %vm564, 1, 0
  %v575 = vsel %vm565, 1, 0
  %v576 = vsel %vm566, 1, 0
  %v577 = vsel %vm567, 1, 0
  %v578 = vcvt.s32.f32 %v570
  %v579 = vcvt.s32.f32 %v571
  %v580 = vcvt.s32.f32 %v572
  %v581 = vcvt.s32.f32 %v573
  %v582 = vcvt.s32.f32 %v574
  %v583 = vcvt.s32.f32 %v575
  %v584 = vcvt.s32.f32 %v576
  %v585 = vcvt.s32.f32 %v577
  %v587 = vsel %vm336, %v568, 0
  %v590 = vsel %vm336, %v569, 0
  %592 = vmatprep.subr.mxu0 0.0
  %593 = vmatpush1.msra.mxu0 0.0
  %594 = vmatprep.subr.mxu0 0.0
  %595 = vmatpush1.msra.mxu0 0.0
  %596 = vmatprep.subr.mxu0 0.0
  %597 = vmatpush1.msra.mxu0 0.0
  %598 = vmatprep.subr.mxu0 0.0
  %599 = vmatpush1.msra.mxu0 0.0
  %600 = vmatprep.subr.mxu0 0.0
  %601 = vmatpush1.msra.mxu0 0.0
  %602 = vmatprep.subr.mxu0 0.0
  %603 = vmatpush1.msra.mxu0 0.0
  %604 = vmatprep.subr.mxu0 0.0
  %605 = vmatpush1.msra.mxu0 0.0
  %606 = vmatprep.subr.mxu0 0.0
  %607 = vmatpush1.msra.mxu0 0.0
  %608 = vmatprep.subr.mxu0 0.0
  %609 = vmatpush1.msra.mxu0 %v585
  %610 = vmatprep.subr.mxu0 0.0
  %611 = vmatpush1.msra.mxu0 %v584
  %612 = vmatprep.subr.mxu0 0.0
  %613 = vmatpush1.msra.mxu0 %v583
  %614 = vmatprep.subr.mxu0 0.0
  %615 = vmatpush1.msra.mxu0 %v582
  %616 = vmatprep.subr.mxu0 0.0
  %617 = vmatpush1.msra.mxu0 %v581
  %618 = vmatprep.subr.mxu0 0.0
  %619 = vmatpush1.msra.mxu0 %v580
  %620 = vmatprep.subr.mxu0 0.0
  %621 = vmatpush1.msra.mxu0 %v579
  %622 = vmatprep.subr.mxu0 0.0
  %623 = vmatpush1.msra.mxu0 %v578
  %624 = vmatprep.subr.mxu0 0.0
  %625 = vmatpush2.msra.mxu0 0.0
  %626 = vmatprep.subr.mxu0 0.0
  %627 = vmatpush2.msra.mxu0 0.0
  %628 = vmatprep.subr.mxu0 0.0
  %629 = vmatpush2.msra.mxu0 0.0
  %630 = vmatprep.subr.mxu0 0.0
  %631 = vmatpush2.msra.mxu0 0.0
  %632 = vmatprep.subr.mxu0 0.0
  %633 = vmatpush2.msra.mxu0 0.0
  %634 = vmatprep.subr.mxu0 0.0
  %635 = vmatpush2.msra.mxu0 0.0
  %636 = vmatprep.subr.mxu0 0.0
  %637 = vmatpush2.msra.mxu0 0.0
  %638 = vmatprep.subr.mxu0 0.0
  %639 = vmatpush2.msra.mxu0 0.0
  %640 = vmatprep.subr.mxu0 0.0
  %641 = vmatpush2.msra.mxu0 0.0
  %642 = vmatprep.subr.mxu0 0.0
  %643 = vmatpush2.msra.mxu0 0.0
  %644 = vmatprep.subr.mxu0 0.0
  %645 = vmatpush2.msra.mxu0 0.0
  %646 = vmatprep.subr.mxu0 0.0
  %647 = vmatpush2.msra.mxu0 0.0
  %648 = vmatprep.subr.mxu0 0.0
  %649 = vmatpush2.msra.mxu0 0.0
  %650 = vmatprep.subr.mxu0 0.0
  %651 = vmatpush2.msra.mxu0 0.0
  %652 = vmatprep.subr.mxu0 0.0
  %653 = vmatpush2.msra.mxu0 0.0
  %654 = vmatprep.subr.mxu0 0.0
  %655 = vmatpush2.msra.mxu0 0.0
  %656 = vmatprep.mubr.f32.mxu0 0.0
  %657 = vmatmul.mubr.f32.gmra.mxu0 %v587
  %v658 = vpop.f32.mrf.mxu0
  %v659 = vadd.f32 0.0, %v658
  %v660 = vpop.f32.mrf.mxu0
  %661 = vmatprep.mubr.f32.mxu0 0.0
  %662 = vmatmul.mubr.f32.gmra.mxu0 %v590
  %v663 = vpop.f32.mrf.mxu0
  %v664 = vadd.f32 0.0, %v663
  %v665 = vpop.f32.mrf.mxu0
  %666 = vdwg.mxu0
  %v667 = vadd.f32 %v491, %v659
  %v668 = vadd.f32 %v496, %v664
  %669 = vst [vmem:[%s4 + $0x2] sm:$0x1] %v559
  %670 = vst [vmem:[%s3] sm:$0xff] %v667
  %671 = vst [vmem:[%s3 + $0x8] sm:$0xff] %v668
  %v672 = vlaneseq
  %v673 = vand.u32 %v672, 127
  %s674 = smul.u32 0, 128
  %v675 = vstv %s674
  %v676 = vadd.s32 %v673, %v675
  %vm677 = vcmp.lt.s32.totalorder %v676, 128
  %v678 = vsel %vm677, 1, 0
  %v679 = vcvt.s32.f32 %v678
  %v680 = vsub.f32 %v667, %v17
  %v681 = vsub.f32 %v668, %v18
  %v682 = vmul.f32 %v680, %v679
  %v683 = vmul.f32 %v681, %v679
  %v684 = vmul.f32 %v682, %v682
  %v685 = vmul.f32 %v683, %v683
  %v686 = vadd.f32 %v684, %v685
  %687 = vadd.xlane.f32.xlu0 %v686
  %v688 = vpop.xlane.xlu0 %687
  %v689 = vrot.slane %v688, 4
  %v690 = vadd.f32 %v688, %v689
  %v691 = vrot.slane %v690, 2
  %v692 = vadd.f32 %v690, %v691
  %v693 = vrot.slane %v692, 1
  %v694 = vadd.f32 %v692, %v693
  %s695 = vtos %v694
  %v696 = vstv %s695
  %v697 = vadd.f32 %v696, 0.0
  %698 = vst [vmem:[%s5] sm:$0x1] %v697
  // Predicated region
  $region14: #{codebook_topk_forward.1} parent=0 // pred_check
    _
  $region15: #{codebook_topk_forward.1} parent=0 // pred_check_branch
    %700 = sbr.rel (0) target = $region17
  $region16: #{codebook_topk_forward.1} parent=0 // pred_region
    _
  $region17: #{codebook_topk_forward.1} parent=0 // pred_fallthru
    _
  // Predicated region
  $region18: #{codebook_topk_forward.1} parent=0 // pred_check
    _
  $region19: #{codebook_topk_forward.1} parent=0 // pred_check_branch
    %702 = sbr.rel (0) target = $region21
  $region20: #{codebook_topk_forward.1} parent=0 // pred_region
    _
  $region21: #{codebook_topk_forward.1} parent=0 // pred_fallthru
    _
  // Predicated region
  $region22: #{codebook_topk_forward.1} parent=0 // pred_check
    _
  $region23: #{codebook_topk_forward.1} parent=0 // pred_check_branch
    %704 = sbr.rel (0) target = $region25
  $region24: #{codebook_topk_forward.1} parent=0 // pred_region
    _
  $region25: #{codebook_topk_forward.1} parent=0 // pred_fallthru
    _
  // Predicated region
  $region26: #{codebook_topk_forward.1} parent=0 // pred_check
    _
  $region27: #{codebook_topk_forward.1} parent=0 // pred_check_branch
    %706 = sbr.rel (0) target = $region29
  $region28: #{codebook_topk_forward.1} parent=0 // pred_region
    _
  $region29: #{codebook_topk_forward.1} parent=0 // pred_fallthru
    _
  // Predicated region
  $region30: #{codebook_topk_forward.1} parent=0 // pred_check
    _
  $region31: #{codebook_topk_forward.1} parent=0 // pred_check_branch
    %708 = sbr.rel (0) target = $region33
  $region32: #{codebook_topk_forward.1} parent=0 // pred_region
    _
  $region33: #{codebook_topk_forward.1} parent=0 // pred_fallthru
    _
  // Predicated region
  $region34: #{codebook_topk_forward.1} parent=0 // pred_check
    _
  $region35: #{codebook_topk_forward.1} parent=0 // pred_check_branch
    %710 = sbr.rel (0) target = $region37
  $region36: #{codebook_topk_forward.1} parent=0 // pred_region
    _
  $region37: #{codebook_topk_forward.1} parent=0 // pred_fallthru
    _

</llo_original>
